<compile_context>
chip_gen: v6e
topology: v6e:2x2x1
jax: 0.10.0
libtpu: 0.0.40
codegen_flags: <defaults>
</compile_context>

<pallas_src>
import functools

import jax
import jax.numpy as jnp
from jax.experimental import pallas as pl
from jax.experimental.pallas import tpu as pltpu


def _round_up(x, m):
    return ((x + m - 1) // m) * m


@functools.lru_cache(maxsize=1)
def _vmem_budget_bytes():
    """Per-generation VMEM budget used for tile sizing / vmem_limit_bytes."""
    try:
        kind = jax.devices()[0].device_kind.lower()
    except Exception:  # pragma: no cover - defensive
        kind = ""
    if "v5" in kind or "v6" in kind:
        return 96 * 1024 * 1024   # 128 MiB physical -> generous scoped limit
    return 40 * 1024 * 1024       # v7x: 64 MiB physical / 32 MiB default scope


def _fc_kernel(x_ref, w_ref, b_ref, o_ref):
    """o[i,j] = sum_k x[i,k] @ w[k,j]  (+ bias on the last K step).

    The f32 output block is resident across the K grid axis (its index_map
    ignores k), so it doubles as the accumulator -- no extra VMEM scratch.
    """
    k = pl.program_id(2)

    @pl.when(k == 0)
    def _():
        o_ref[...] = jnp.zeros_like(o_ref)

    o_ref[...] += jnp.dot(
        x_ref[...].astype(jnp.bfloat16),      # VPU cast, hidden under the MXU
        w_ref[...],
        preferred_element_type=jnp.float32,
    )

    @pl.when(k == pl.num_programs(2) - 1)
    def _():
        o_ref[...] += b_ref[...]              # (1, tn) broadcasts over rows


@functools.partial(jax.jit, static_argnames=("n", "tk", "dp", "tn", "np_"))
def _fc_pallas_2d(x2d, w_pad, b_pad, *, n, tk, dp, tn, np_):
    m, d = x2d.shape
    n_tiles = np_ // tn
    k_tiles = dp // tk

    # Cast x in the wrapper only when it would be re-streamed many times at
    # f32 (>= 3 N tiles); otherwise cast in-kernel and skip the extra HBM pass.
    cast_in_wrapper = n_tiles >= 3 and jnp.dtype(x2d.dtype).itemsize > 2
    xb = 2 if cast_in_wrapper else jnp.dtype(x2d.dtype).itemsize

    budget = _vmem_budget_bytes()
    target = (budget * 3) // 5               # leave pipelining headroom

    def footprint(tm_):
        return (2 * tm_ * tk * xb            # double-buffered x tile
                + 2 * tk * tn * 2            # double-buffered bf16 w tile
                + 2 * tn * 4                 # bias
                + 2 * tm_ * tn * 4)          # double-buffered f32 out tile

    tm = 8
    for cand in (2048, 1024, 512, 256, 128, 64, 32, 16, 8):
        if footprint(cand) <= target:
            tm = cand
            break
    tm = min(tm, max(8, _round_up(m, 8)))

    # Give both v7x TensorCores work: ensure >= 2 tiles on a parallel axis
    # (one extra grid step, harmless on single-TC v5e/v6e).
    if pl.cdiv(m, tm) * n_tiles < 2 and m >= 256:
        tm = max(8, _round_up((m + 1) // 2, 8))

    grid = (pl.cdiv(m, tm), n_tiles, k_tiles)

    xc = x2d
    if cast_in_wrapper:
        xc = xc.astype(jnp.bfloat16)
    if dp != d:                               # only when K is streamed in tiles
        xc = jnp.pad(xc, ((0, 0), (0, dp - d)))

    cost = pl.CostEstimate(
        flops=2 * m * np_ * dp,
        transcendentals=0,
        bytes_accessed=int(m * dp * xb * n_tiles
                           + dp * np_ * 2 * grid[0]
                           + m * np_ * 4),
    )

    out = pl.pallas_call(
        _fc_kernel,
        out_shape=jax.ShapeDtypeStruct((m, np_), jnp.float32),
        grid_spec=pltpu.PrefetchScalarGridSpec(
            num_scalar_prefetch=0,
            grid=grid,
            in_specs=[
                pl.BlockSpec((tm, tk), lambda i, j, k: (i, k)),
                pl.BlockSpec((tk, tn), lambda i, j, k: (k, j)),
                pl.BlockSpec((1, tn), lambda i, j, k: (0, j)),
            ],
            out_specs=pl.BlockSpec((tm, tn), lambda i, j, k: (i, j)),
        ),
        compiler_params=pltpu.CompilerParams(
            dimension_semantics=("parallel", "parallel", "arbitrary"),
            vmem_limit_bytes=budget,
        ),
        cost_estimate=cost,
    )(xc, w_pad, b_pad)

    if np_ != n:
        out = out[:, :n]
    return out


class FCLayersPallas:
    """JAX/Pallas re-implementation of model.modules.FCLayers (eval mode)."""

    _K_WHOLE_MAX = 2048   # keep K un-tiled up to this feature dim
    _K_TILE = 2048        # K tile when streaming larger feature dims

    def __init__(self, feat_dim, num_classes, key):
        kw, kb = jax.random.split(key)
        bound = 1.0 / float(feat_dim) ** 0.5
        # nn.Linear default init: U(-1/sqrt(feat_dim), 1/sqrt(feat_dim)).
        # Stored transposed vs. PyTorch: (feat_dim, num_classes).
        self.w = jax.random.uniform(
            kw, (feat_dim, num_classes), jnp.float32, -bound, bound)
        self.b = jax.random.uniform(
            kb, (1, num_classes), jnp.float32, -bound, bound)

        d, n = feat_dim, num_classes

        # ---- static N tiling (lane-dense, collapse j axis when it fits) ----
        np_ = _round_up(n, 128)
        if np_ <= 512:
            tn = np_
        else:
            np_ = _round_up(n, 256)           # keep tiles 256-aligned (v6e MXU)
            tn = 512 if np_ % 512 == 0 else 256

        # ---- static K tiling ----
        if d <= self._K_WHOLE_MAX:
            tk, dp = d, d                     # single K step, no x padding
        else:
            tk = self._K_TILE
            dp = _round_up(d, tk)

        # ---- one-time weight/bias cast + pad (static across calls) ----
        wc = self.w.astype(jnp.bfloat16)
        if (dp, np_) != (d, n):
            wc = jnp.pad(wc, ((0, dp - d), (0, np_ - n)))
        bc = self.b
        if np_ != n:
            bc = jnp.pad(bc, ((0, 0), (0, np_ - n)))
        self._wc = jax.device_put(wc)
        self._bc = jax.device_put(bc)
        self._n, self._tk, self._dp, self._tn, self._np = n, tk, dp, tn, np_

    def _fc(self, x2d):
        return _fc_pallas_2d(
            x2d, self._wc, self._bc,
            n=self._n, tk=self._tk, dp=self._dp, tn=self._tn, np_=self._np)

    def __call__(self, x):
        # nn.Dropout() in eval mode is the identity.
        if x.ndim == 3:
            b, t, d = x.shape
            return self._fc(x.reshape(b * t, d)).reshape(b, t, -1)
        elif x.ndim == 2:
            return self._fc(x)
        else:
            raise ValueError(f"Unsupported input rank: {x.ndim}")


if __name__ == "__main__":
    key = jax.random.PRNGKey(0)
    k_param, k_x3, k_x2 = jax.random.split(key, 3)

    feat_dim = 32
    num_classes = 8
    batch, seq = 2, 8

    # NOTE: at these toy shapes launch overhead dominates and plain jnp.dot
    # would win; the Pallas path is exercised for correctness and pays off
    # once M*N*D reaches tens of MFLOPs.
    module = FCLayersPallas(feat_dim, num_classes, k_param)

    # 3-D path: (b, t, d) -> (b, t, num_classes)
    x3 = jax.random.normal(k_x3, (batch, seq, feat_dim), jnp.float32)
    y3 = module(x3)
    jax.block_until_ready(y3)

    # 2-D path: (n, d) -> (n, num_classes)
    x2 = jax.random.normal(k_x2, (batch * seq, feat_dim), jnp.float32)
    y2 = module(x2)
    jax.block_until_ready(y2)

    # bf16-consistent reference (tight tolerance) and full-f32 reference
    # (loose tolerance accounting only for bf16 rounding of matmul operands).
    def ref_bf16(x2d):
        xc = x2d.astype(jnp.bfloat16).astype(jnp.float32)
        wc = module.w.astype(jnp.bfloat16).astype(jnp.float32)
        return jnp.dot(xc, wc, precision=jax.lax.Precision.HIGHEST) + module.b

    ref3_t = ref_bf16(x3.reshape(batch * seq, feat_dim)).reshape(batch, seq, -1)
    ref2_t = ref_bf16(x2)
    ref3_f = (x3.reshape(batch * seq, feat_dim) @ module.w + module.b).reshape(
        batch, seq, -1)
    ref2_f = x2 @ module.w + module.b

    assert y3.shape == (batch, seq, num_classes)
    assert y2.shape == (batch * seq, num_classes)
    assert y3.dtype == jnp.float32 and y2.dtype == jnp.float32
    assert jnp.allclose(y3, ref3_t, atol=1e-4, rtol=1e-4)
    assert jnp.allclose(y2, ref2_t, atol=1e-4, rtol=1e-4)
    assert jnp.allclose(y3, ref3_f, atol=5e-2, rtol=5e-2)
    assert jnp.allclose(y2, ref2_f, atol=5e-2, rtol=5e-2)

    print("KERNEL_OK")
</pallas_src>

<mosaic_0001>
module attributes {stable_mosaic.version = 11 : i64} {
  func.func @_fc_kernel(%arg0: i32, %arg1: i32, %arg2: i32, %arg3: memref<16x32xf32, #tpu.memory_space<vmem>>, %arg4: memref<32x128xbf16, #tpu.memory_space<vmem>>, %arg5: memref<1x128xf32, #tpu.memory_space<vmem>>, %arg6: memref<16x128xf32, #tpu.memory_space<vmem>>) attributes {dimension_semantics = [#tpu.dimension_semantics<parallel>, #tpu.dimension_semantics<parallel>, #tpu.dimension_semantics<arbitrary>], iteration_bounds = array<i64: 1, 1, 1>, scalar_prefetch = 0 : i64, scratch_operands = 0 : i64, tpu.core_type = #tpu.core_type<tc>, window_params = [{transform_indices = @transform_0, window_bounds = array<i64: 16, 32>}, {transform_indices = @transform_1, window_bounds = array<i64: 32, 128>}, {transform_indices = @transform_2, window_bounds = array<i64: 1, 128>}, {transform_indices = @transform_3, window_bounds = array<i64: 16, 128>}]} {
    %c0_i32 = arith.constant 0 : i32
    %0 = arith.cmpi eq, %arg2, %c0_i32 : i32
    %1 = arith.extui %0 : i1 to i32
    %c0_i32_0 = arith.constant 0 : i32
    %2 = arith.cmpi ne, %1, %c0_i32_0 : i32
    scf.if %2 {
      %cst_10 = arith.constant 0.000000e+00 : f32
      %13 = vector.broadcast %cst_10 : f32 to vector<16x128xf32>
      %c0_11 = arith.constant 0 : index
      %c0_12 = arith.constant 0 : index
      %14 = vector.load %arg6[%c0_11, %c0_12] : memref<16x128xf32, #tpu.memory_space<vmem>>, vector<16x128xf32>
      tpu.vector_store %arg6[%c0_11, %c0_12], %13 {strides = array<i32>} : memref<16x128xf32, #tpu.memory_space<vmem>>, vector<16x128xf32>,
    } else {
    }
    %c0 = arith.constant 0 : index
    %c0_1 = arith.constant 0 : index
    %3 = vector.load %arg6[%c0, %c0_1] : memref<16x128xf32, #tpu.memory_space<vmem>>, vector<16x128xf32>
    %c0_2 = arith.constant 0 : index
    %c0_3 = arith.constant 0 : index
    %4 = vector.load %arg3[%c0_2, %c0_3] : memref<16x32xf32, #tpu.memory_space<vmem>>, vector<16x32xf32>
    %5 = arith.truncf %4 : vector<16x32xf32> to vector<16x32xbf16>
    %c0_4 = arith.constant 0 : index
    %c0_5 = arith.constant 0 : index
    %6 = vector.load %arg4[%c0_4, %c0_5] : memref<32x128xbf16, #tpu.memory_space<vmem>>, vector<32x128xbf16>
    %cst = arith.constant dense<0.000000e+00> : vector<16x128xf32>
    %7 = tpu.matmul %5, %6, %cst {dimension_numbers = #tpu.dot_dimension_numbers<[1], [0], [0], [1], [0, 0, 1, 1], [], []>} : vector<16x32xbf16>, vector<32x128xbf16>, vector<16x128xf32> -> vector<16x128xf32>
    %8 = arith.addf %3, %7 : vector<16x128xf32>
    %c0_6 = arith.constant 0 : index
    %c0_7 = arith.constant 0 : index
    %9 = vector.load %arg6[%c0_6, %c0_7] : memref<16x128xf32, #tpu.memory_space<vmem>>, vector<16x128xf32>
    tpu.vector_store %arg6[%c0_6, %c0_7], %8 {strides = array<i32>} : memref<16x128xf32, #tpu.memory_space<vmem>>, vector<16x128xf32>,
    %c0_i32_8 = arith.constant 0 : i32
    %10 = arith.cmpi eq, %arg2, %c0_i32_8 : i32
    %11 = arith.extui %10 : i1 to i32
    %c0_i32_9 = arith.constant 0 : i32
    %12 = arith.cmpi ne, %11, %c0_i32_9 : i32
    scf.if %12 {
      %c0_10 = arith.constant 0 : index
      %c0_11 = arith.constant 0 : index
      %13 = vector.load %arg6[%c0_10, %c0_11] : memref<16x128xf32, #tpu.memory_space<vmem>>, vector<16x128xf32>
      %c0_12 = arith.constant 0 : index
      %c0_13 = arith.constant 0 : index
      %14 = vector.load %arg5[%c0_12, %c0_13] : memref<1x128xf32, #tpu.memory_space<vmem>>, vector<1x128xf32>
      %15 = vector.broadcast %14 : vector<1x128xf32> to vector<16x128xf32>
      %16 = arith.addf %13, %15 : vector<16x128xf32>
      %c0_14 = arith.constant 0 : index
      %c0_15 = arith.constant 0 : index
      %17 = vector.load %arg6[%c0_14, %c0_15] : memref<16x128xf32, #tpu.memory_space<vmem>>, vector<16x128xf32>
      tpu.vector_store %arg6[%c0_14, %c0_15], %16 {strides = array<i32>} : memref<16x128xf32, #tpu.memory_space<vmem>>, vector<16x128xf32>,
    } else {
    }
    return
  }
  func.func @transform_0(%arg0: i32, %arg1: i32, %arg2: i32) -> (i32, i32) {
    %c0_i32 = arith.constant 0 : i32
    return %arg0, %arg2 : i32, i32
  }
  func.func @transform_1(%arg0: i32, %arg1: i32, %arg2: i32) -> (i32, i32) {
    %c0_i32 = arith.constant 0 : i32
    return %arg2, %arg1 : i32, i32
  }
  func.func @transform_2(%arg0: i32, %arg1: i32, %arg2: i32) -> (i32, i32) {
    %c0_i32 = arith.constant 0 : i32
    %c0_i32_0 = arith.constant 0 : i32
    return %c0_i32, %arg1 : i32, i32
  }
  func.func @transform_3(%arg0: i32, %arg1: i32, %arg2: i32) -> (i32, i32) {
    %c0_i32 = arith.constant 0 : i32
    return %arg0, %arg1 : i32, i32
  }
}

</mosaic_0001>

<llo_original>
// kernel: _fc_pallas_2d.1
$region0: #{_fc_pallas_2d.1}
  #allocation0 [shape = 'u32[]', space=smem, size = 0x4, offset = 0x4, fixed_abs, tag = 'smem constant byte address 0x4 - core index']
  #allocation1 [shape = 'u32[144,128]{1,0:T(1,128)}', space=vmem, size = 0x12000, scoped, tag = 'internal scratch']
  %s0 = inlined_call_operand.hbm [shape: f32[16,32], index: 0, kind: input, shape index: {}]
  %s1 = inlined_call_operand.hbm [shape: bf16[32,128], index: 1, kind: input, shape index: {}]
  %s2 = inlined_call_operand.vmem [shape: f32[1,128], index: 2, kind: input, shape index: {}]
  %s3 = inlined_call_operand.vmem [shape: f32[16,128], index: 3, kind: output, shape index: {}]
  %s4 = sld [smem:[#allocation0]]
  $region38: #{_fc_pallas_2d.1} parent=0
    _
  %s6 = ssub.s32 1, %s4
  %s7 = scalar_select 0, %s6, %s4
  $region1: #{_fc_pallas_2d.1} parent=0
    #allocation2 [shape = 'u8[8192]{0}', space=vmem, size = 0x2000, scoped, tag = 'input window, operand 0, single buffered']
    #allocation3 [shape = 's32[1]{0}', space=sflag, size = 0x4, scoped, tag = 'scoped memory for _fc_pallas_2d.1']
    #allocation4 [shape = 'u8[8192]{0}', space=vmem, size = 0x2000, scoped, tag = 'input window, operand 1, single buffered']
    #allocation5 [shape = 's32[1]{0}', space=sflag, size = 0x4, scoped, tag = 'scoped memory for _fc_pallas_2d.1']
    %8 = vsyncpa [#allocation3], 0
    %9 = vsyncpa [#allocation5], 0
    // Predicated region
    $region2: #{_fc_pallas_2d.1} parent=1 // pred_check
      _
    $region3: #{_fc_pallas_2d.1} parent=1 // pred_check_branch
      %11 = sbr.rel (0) target = $region5
    $region4: #{_fc_pallas_2d.1} parent=1 // pred_region
      %s13 = ssub.s32 256, 256
      %14 = vsyncadd [#allocation3], %s13
      %s15 = sshll.u32 [#allocation2], 4
      %s16 = int_to_ptr.vmem [resolvable:$true] %s15
      %21 = dma.hbm_to_vmem [thread:$0]  %s0, 256, %s16, [#allocation3], 128, 128, 8
    $region5: #{_fc_pallas_2d.1} parent=1 // pred_fallthru
      _
    // Predicated region
    $region6: #{_fc_pallas_2d.1} parent=1 // pred_check
      _
    $region7: #{_fc_pallas_2d.1} parent=1 // pred_check_branch
      %23 = sbr.rel (0) target = $region9
    $region8: #{_fc_pallas_2d.1} parent=1 // pred_region
      %s25 = ssub.s32 256, 256
      %26 = vsyncadd [#allocation5], %s25
      %s27 = sshll.u32 [#allocation4], 4
      %s28 = int_to_ptr.vmem [resolvable:$true] %s27
      %33 = dma.hbm_to_vmem [thread:$0]  %s1, 256, %s28, [#allocation5], 64, 64, 4
    $region9: #{_fc_pallas_2d.1} parent=1 // pred_fallthru
      _
    // Predicated region
    $region10: #{_fc_pallas_2d.1} parent=1 // pred_check
      _
    $region11: #{_fc_pallas_2d.1} parent=1 // pred_check_branch
      %35 = sbr.rel (0) target = $region13
    $region12: #{_fc_pallas_2d.1} parent=1 // pred_region
      _
    $region13: #{_fc_pallas_2d.1} parent=1 // pred_fallthru
      _
    // Predicated region
    $region14: #{_fc_pallas_2d.1} parent=1 // pred_check
      _
    $region15: #{_fc_pallas_2d.1} parent=1 // pred_check_branch
      %37 = sbr.rel (0) target = $region17
    $region16: #{_fc_pallas_2d.1} parent=1 // pred_region
      %38 = dma.done [#allocation3], 256
    $region17: #{_fc_pallas_2d.1} parent=1 // pred_fallthru
      _
    // Predicated region
    $region18: #{_fc_pallas_2d.1} parent=1 // pred_check
      _
    $region19: #{_fc_pallas_2d.1} parent=1 // pred_check_branch
      %40 = sbr.rel (0) target = $region21
    $region20: #{_fc_pallas_2d.1} parent=1 // pred_region
      %41 = dma.done [#allocation5], 256
    $region21: #{_fc_pallas_2d.1} parent=1 // pred_fallthru
      _
    %p43 = scmp.eq.s32.totalorder 0, 0
    // Predicated region
    $region22: #{_fc_pallas_2d.1} parent=1 // pred_check
      %p44 = pneg %p43
    $region23: #{_fc_pallas_2d.1} parent=1 // pred_check_branch
      %46 = sbr.rel (%p44) target = $region25
    $region24: #{_fc_pallas_2d.1} parent=1 // pred_region
      %47 = vst [vmem:[%s3] sm:$0xff] 0.0
      %48 = vst [vmem:[%s3 + $0x8] sm:$0xff] 0.0
    $region25: #{_fc_pallas_2d.1} parent=1 // pred_fallthru
      _
    %v49 = vld [vmem:[%s3] sm:$0xff]
    %v50 = vld [vmem:[%s3 + $0x8] sm:$0xff]
    %v51 = vld [vmem:[#allocation2] sm:$0xff]
    %v52 = vld [vmem:[#allocation2 + $0x8] sm:$0xff]
    %v53 = vpack.c.bf16 %v52, %v51
    %v54 = vld [vmem:[#allocation4] sm:$0xf]
    %v55 = vld [vmem:[#allocation4 + $0x4] sm:$0xf]
    %v56 = vld [vmem:[#allocation4 + $0x8] sm:$0xf]
    %v57 = vld [vmem:[#allocation4 + $0xc] sm:$0xf]
    %v62 = vunpack.c.l.b16 %v54
    %v63 = vunpack.c.l.b16 %v55
    %v64 = vunpack.c.l.b16 %v56
    %v65 = vunpack.c.l.b16 %v57
    %v66 = vpack.c.b16 %v63, %v62
    %v67 = vpack.c.b16 %v65, %v64
    %vm70 = vcmask 261120
    %v72 = vsel %vm70, %v53, 0
    %74 = vmatprep.subr.bf16.mxu0 0
    %75 = vmatpush1.bf16.msra.mxu0 0
    %76 = vmatprep.subr.bf16.mxu0 0
    %77 = vmatpush1.bf16.msra.mxu0 0
    %78 = vmatprep.subr.bf16.mxu0 0
    %79 = vmatpush1.bf16.msra.mxu0 0
    %80 = vmatprep.subr.bf16.mxu0 0
    %81 = vmatpush1.bf16.msra.mxu0 0
    %82 = vmatprep.subr.bf16.mxu0 0
    %83 = vmatpush1.bf16.msra.mxu0 0
    %84 = vmatprep.subr.bf16.mxu0 0
    %85 = vmatpush1.bf16.msra.mxu0 0
    %86 = vmatprep.subr.bf16.mxu0 0
    %87 = vmatpush1.bf16.msra.mxu0 %v67
    %88 = vmatprep.subr.bf16.mxu0 0
    %89 = vmatpush1.bf16.msra.mxu0 %v66
    %90 = vmatprep.subr.bf16.mxu0 0
    %91 = vmatpush2.bf16.msra.mxu0 0
    %92 = vmatprep.subr.bf16.mxu0 0
    %93 = vmatpush2.bf16.msra.mxu0 0
    %94 = vmatprep.subr.bf16.mxu0 0
    %95 = vmatpush2.bf16.msra.mxu0 0
    %96 = vmatprep.subr.bf16.mxu0 0
    %97 = vmatpush2.bf16.msra.mxu0 0
    %98 = vmatprep.subr.bf16.mxu0 0
    %99 = vmatpush2.bf16.msra.mxu0 0
    %100 = vmatprep.subr.bf16.mxu0 0
    %101 = vmatpush2.bf16.msra.mxu0 0
    %102 = vmatprep.subr.bf16.mxu0 0
    %103 = vmatpush2.bf16.msra.mxu0 0
    %104 = vmatprep.subr.bf16.mxu0 0
    %105 = vmatpush2.bf16.msra.mxu0 0
    %106 = vmatprep.mubr.bf16.mxu0 0
    %107 = vmatmul.mubr.bf16.gmra.mxu0 %v72
    %v108 = vpop.f32.mrf.mxu0
    %v109 = vadd.f32 0.0, %v108
    %v110 = vpop.f32.mrf.mxu0
    %v111 = vpop.f32.mrf.mxu0
    %v112 = vadd.f32 0.0, %v111
    %v113 = vpop.f32.mrf.mxu0
    %114 = vdwg.mxu0
    %v115 = vadd.f32 %v49, %v109
    %v116 = vadd.f32 %v50, %v112
    %117 = vst [vmem:[%s3] sm:$0xff] %v115
    %118 = vst [vmem:[%s3 + $0x8] sm:$0xff] %v116
    // Predicated region
    $region26: #{_fc_pallas_2d.1} parent=1 // pred_check
      %p119 = pneg %p43
    $region27: #{_fc_pallas_2d.1} parent=1 // pred_check_branch
      %121 = sbr.rel (%p119) target = $region29
    $region28: #{_fc_pallas_2d.1} parent=1 // pred_region
      %v122 = vld [vmem:[%s3] sm:$0xff]
      %v123 = vld [vmem:[%s3 + $0x8] sm:$0xff]
      %v124 = vld [vmem:[%s2] sm:$0x1]
      %v126 = vlaneseq
      %v127 = vshrl.u32 %v126, 7
      %v128 = vsub.s32 0, %v127
      %v129 = vrot.slane %v124, %v128
      %v131 = vadd.f32 %v122, %v129
      %v132 = vadd.f32 %v123, %v129
      %133 = vst [vmem:[%s3] sm:$0xff] %v131
      %134 = vst [vmem:[%s3 + $0x8] sm:$0xff] %v132
    $region29: #{_fc_pallas_2d.1} parent=1 // pred_fallthru
      _
    // Predicated region
    $region30: #{_fc_pallas_2d.1} parent=1 // pred_check
      _
    $region31: #{_fc_pallas_2d.1} parent=1 // pred_check_branch
      %136 = sbr.rel (0) target = $region33
    $region32: #{_fc_pallas_2d.1} parent=1 // pred_region
      _
    $region33: #{_fc_pallas_2d.1} parent=1 // pred_fallthru
      _
    // Predicated region
    $region34: #{_fc_pallas_2d.1} parent=1 // pred_check
      _
    $region35: #{_fc_pallas_2d.1} parent=1 // pred_check_branch
      %138 = sbr.rel (0) target = $region37
    $region36: #{_fc_pallas_2d.1} parent=1 // pred_region
      _
    $region37: #{_fc_pallas_2d.1} parent=1 // pred_fallthru
      _
    %139 = vsyncpa [#allocation3], 1
    %140 = vsyncpa [#allocation5], 1

</llo_original>
